<compile_context>
chip_gen: v7x
topology: tpu7x:2x2x1
jax: 0.10.0
libtpu: 0.0.40
codegen_flags: <defaults>
</compile_context>

<pallas_src>
import jax
import jax.numpy as jnp
from jax import lax
from jax.experimental import pallas as pl
from jax.experimental.pallas import tpu as pltpu

_LN_EPS = 1e-5  # torch.nn.LayerNorm default eps


def _apply_activation(h, act, slope):
    # Activation math kept in f32 (v5e VPU/EUP have no bf16 support).
    if act == "relu":
        return jnp.maximum(h, 0.0)
    if act == "lrelu":
        return jnp.where(h > 0, h, slope * h)
    if act == "tanh":
        return jnp.tanh(h)
    if act == "xtanh":
        return jnp.tanh(h) + slope * h
    if act == "sigmoid":
        return jax.nn.sigmoid(h)
    if act == "none":
        return h
    raise ValueError(f"Incorrect activation: {act}")


def make_mlp_kernel(layer_cfgs, slope):
    """Fused MLP kernel, feature-major.

    layer_cfgs: tuple of (activation, has_skip, has_ln) per layer.
    Kernel args: x_ref (D_in, bt), then per layer: w (d_out, d_in), b (d_out,1)
    and, if ln, gamma (d_out,1), beta (d_out,1); finally out_ref (D_out, bt).
    The batch tile is the lane (last) axis everywhere.
    """

    def kernel(x_ref, *refs):
        out_ref = refs[-1]
        prefs = refs[:-1]
        h = x_ref[...].astype(jnp.float32)                       # (d_in, bt)
        p = 0
        for act, has_skip, has_ln in layer_cfgs:
            w = prefs[p][...].astype(jnp.float32)                # (d_out, d_in)
            b = prefs[p + 1][...].astype(jnp.float32)            # (d_out, 1)
            p += 2
            z = jnp.dot(w, h, preferred_element_type=jnp.float32) + b
            if has_skip:                                         # Skip_Layer: fc(x) + x
                z = z + h
            if has_ln:                                           # nn.LayerNorm(features)
                g = prefs[p][...].astype(jnp.float32)            # (d_out, 1)
                beta = prefs[p + 1][...].astype(jnp.float32)     # (d_out, 1)
                p += 2
                mu = jnp.mean(z, axis=0, keepdims=True)          # reduce over features
                var = jnp.mean(jnp.square(z - mu), axis=0, keepdims=True)
                z = (z - mu) * lax.rsqrt(var + _LN_EPS) * g + beta
            h = _apply_activation(z, act, slope)
        out_ref[...] = h.astype(out_ref.dtype)                   # (D_out, bt)

    return kernel


def mlp_forward(x, layers, *, slope=0.1, batch_tile=16384):
    """x: (B, D_in). layers: list of dicts with keys w, b, act, skip, ln."""
    B, D_in = x.shape
    D_out = layers[-1]["w"].shape[0]

    # ---- choose a lane-aligned batch tile (multiple of 128) ----------------
    B128 = ((B + 127) // 128) * 128
    bt = max(128, min((batch_tile // 128) * 128, B128))
    # Prefer >=2 grid steps so v7x megacore can shard the "parallel" axis.
    if B128 // bt < 2 and B128 >= 256:
        bt = max(128, ((B128 // 2) // 128) * 128)
    B_pad = pl.cdiv(B, bt) * bt
    grid = (B_pad // bt,)

    # ---- feature-major, zero-padded input: (D_in, B_pad), batch on lanes ---
    xt = jnp.zeros((D_in, B_pad), x.dtype).at[:, :B].set(x.T)

    in_specs = [pl.BlockSpec((D_in, bt), lambda i: (0, i))]
    flat_params = []
    layer_cfgs = []
    for L in layers:
        layer_cfgs.append((L["act"], bool(L["skip"]), L["ln"] is not None))
        arrays = [L["w"], L["b"]]
        if L["ln"] is not None:
            arrays += list(L["ln"])
        for a in arrays:
            # Grid-invariant index_map -> parameters stay resident in VMEM.
            in_specs.append(pl.BlockSpec(a.shape, lambda i: (0, 0)))
            flat_params.append(a)

    kernel = make_mlp_kernel(tuple(layer_cfgs), slope)

    # ---- advisory cost estimate for the XLA scheduler ----------------------
    flops = 2 * B_pad * sum(int(L["w"].shape[0]) * int(L["w"].shape[1])
                            for L in layers)
    transcendentals = 0
    for L in layers:
        d_out = int(L["w"].shape[0])
        if L["act"] in ("tanh", "xtanh", "sigmoid"):
            transcendentals += B_pad * d_out
        if L["ln"] is not None:
            transcendentals += B_pad  # one rsqrt per column
    bytes_accessed = (
        B_pad * (D_in + D_out) * x.dtype.itemsize
        + sum(int(a.size) * a.dtype.itemsize for a in flat_params))

    out_t = pl.pallas_call(
        kernel,
        out_shape=jax.ShapeDtypeStruct((D_out, B_pad), x.dtype),
        grid=grid,
        in_specs=in_specs,
        out_specs=pl.BlockSpec((D_out, bt), lambda i: (0, i)),
        compiler_params=pltpu.CompilerParams(
            dimension_semantics=("parallel",)),
        cost_estimate=pl.CostEstimate(
            flops=flops,
            transcendentals=transcendentals,
            bytes_accessed=bytes_accessed),
    )(xt, *flat_params)

    return out_t[:, :B].T  # back to (B, D_out)


# ---------------------------------------------------------------------------
# Parameter construction mirroring the PyTorch module.
# ---------------------------------------------------------------------------
def init_linear_params(key, in_dim, out_dim):
    """PyTorch nn.Linear default init: U(-1/sqrt(in_dim), 1/sqrt(in_dim)).

    Returns W in PyTorch layout (out_dim, in_dim) and b as (out_dim, 1).
    """
    kw, kb = jax.random.split(key)
    bound = 1.0 / jnp.sqrt(jnp.float32(in_dim))
    w = jax.random.uniform(kw, (out_dim, in_dim), jnp.float32, -bound, bound)
    b = jax.random.uniform(kb, (out_dim, 1), jnp.float32, -bound, bound)
    return w, b


def build_mlp_layers(key, input_dim, output_dim, hidden_dim, n_layers,
                     activation="none", ln=False, skip=False,
                     random_ln_params=False):
    hidden_dims = ([hidden_dim] * (n_layers - 1)
                   if isinstance(hidden_dim, int) else list(hidden_dim))
    acts = ([activation] * (n_layers - 1)
            if isinstance(activation, str) else list(activation))
    dims = [input_dim] + hidden_dims
    layers = []
    for i in range(1, len(dims)):
        key, sub = jax.random.split(key)
        w, b = init_linear_params(sub, dims[i - 1], dims[i])
        ln_params = None
        if ln:
            if random_ln_params:  # stronger correctness check than torch's 1/0 init
                key, kg, kb2 = jax.random.split(key, 3)
                g = jax.random.normal(kg, (dims[i], 1), jnp.float32)
                beta = jax.random.normal(kb2, (dims[i], 1), jnp.float32)
            else:  # torch.nn.LayerNorm default: weight=1, bias=0
                g = jnp.ones((dims[i], 1), jnp.float32)
                beta = jnp.zeros((dims[i], 1), jnp.float32)
            ln_params = (g, beta)
        layers.append(dict(w=w, b=b, act=acts[i - 1],
                           skip=bool(skip and dims[i - 1] == dims[i]),
                           ln=ln_params))
    key, sub = jax.random.split(key)
    w, b = init_linear_params(sub, dims[-1], output_dim)
    layers.append(dict(w=w, b=b, act="none", skip=False, ln=None))
    return layers


def mlp_reference(x, layers, slope=0.1):
    """Pure-JAX batch-major reference matching the PyTorch forward."""
    h = x.astype(jnp.float32)
    for L in layers:
        z = h @ L["w"].T + L["b"][:, 0]
        if L["skip"]:
            z = z + h
        if L["ln"] is not None:
            g, beta = L["ln"]
            mu = jnp.mean(z, axis=-1, keepdims=True)
            var = jnp.mean(jnp.square(z - mu), axis=-1, keepdims=True)
            z = (z - mu) * lax.rsqrt(var + _LN_EPS) * g[:, 0] + beta[:, 0]
        h = _apply_activation(z, L["act"], slope)
    return h.astype(x.dtype)


if __name__ == "__main__":
    key = jax.random.PRNGKey(0)

    # --- Primary config (as realized by the spec):
    # MLP(input_dim=4, output_dim=8, hidden_dim=32, n_layers=3,
    #     activation='lrelu', slope=0.1, ln=False, skip=False)
    key, kx, kp = jax.random.split(key, 3)
    x = jax.random.normal(kx, (16, 4), jnp.float32)   # ragged vs the 128 tile
    layers = build_mlp_layers(kp, 4, 8, 32, 3,
                              activation="lrelu", ln=False, skip=False)
    out = jax.block_until_ready(mlp_forward(x, layers, slope=0.1))
    ref = mlp_reference(x, layers, slope=0.1)
    assert out.shape == (16, 8)
    assert jnp.allclose(out, ref, atol=1e-5, rtol=1e-5)

    # --- Coverage check for the remaining module paths: Skip_Layer (32->32),
    # LayerNorm, xTanh activation, ragged batch spanning 2 grid steps.
    key, kx2, kp2 = jax.random.split(key, 3)
    x2 = jax.random.normal(kx2, (200, 4), jnp.float32)
    layers2 = build_mlp_layers(kp2, 4, 8, 32, 3, activation="xtanh",
                               ln=True, skip=True, random_ln_params=True)
    out2 = jax.block_until_ready(mlp_forward(x2, layers2, slope=0.1))
    ref2 = mlp_reference(x2, layers2, slope=0.1)
    assert out2.shape == (200, 8)
    assert jnp.allclose(out2, ref2, atol=1e-4, rtol=1e-4)

    print("KERNEL_OK")
</pallas_src>

<mosaic_0001>
module attributes {stable_mosaic.version = 11 : i64} {
  func.func @kernel(%arg0: i32, %arg1: memref<4x128xf32, #tpu.memory_space<vmem>>, %arg2: memref<32x4xf32, #tpu.memory_space<vmem>>, %arg3: memref<32x1xf32, #tpu.memory_space<vmem>>, %arg4: memref<32x32xf32, #tpu.memory_space<vmem>>, %arg5: memref<32x1xf32, #tpu.memory_space<vmem>>, %arg6: memref<8x32xf32, #tpu.memory_space<vmem>>, %arg7: memref<8x1xf32, #tpu.memory_space<vmem>>, %arg8: memref<8x128xf32, #tpu.memory_space<vmem>>) attributes {dimension_semantics = [#tpu.dimension_semantics<parallel>], iteration_bounds = array<i64: 1>, scalar_prefetch = 0 : i64, scratch_operands = 0 : i64, tpu.core_type = #tpu.core_type<tc>, window_params = [{transform_indices = @transform_0, window_bounds = array<i64: 4, 128>}, {pipeline_mode = #tpu.pipeline_mode<synchronous>, transform_indices = @transform_1, window_bounds = array<i64: 32, 4>}, {pipeline_mode = #tpu.pipeline_mode<synchronous>, transform_indices = @transform_2, window_bounds = array<i64: 32, 1>}, {pipeline_mode = #tpu.pipeline_mode<synchronous>, transform_indices = @transform_3, window_bounds = array<i64: 32, 32>}, {pipeline_mode = #tpu.pipeline_mode<synchronous>, transform_indices = @transform_4, window_bounds = array<i64: 32, 1>}, {pipeline_mode = #tpu.pipeline_mode<synchronous>, transform_indices = @transform_5, window_bounds = array<i64: 8, 32>}, {pipeline_mode = #tpu.pipeline_mode<synchronous>, transform_indices = @transform_6, window_bounds = array<i64: 8, 1>}, {transform_indices = @transform_7, window_bounds = array<i64: 8, 128>}]} {
    %c0 = arith.constant 0 : index
    %c0_0 = arith.constant 0 : index
    %0 = vector.load %arg1[%c0, %c0_0] : memref<4x128xf32, #tpu.memory_space<vmem>>, vector<4x128xf32>
    %c0_1 = arith.constant 0 : index
    %c0_2 = arith.constant 0 : index
    %1 = vector.load %arg2[%c0_1, %c0_2] : memref<32x4xf32, #tpu.memory_space<vmem>>, vector<32x4xf32>
    %c0_3 = arith.constant 0 : index
    %c0_4 = arith.constant 0 : index
    %2 = vector.load %arg3[%c0_3, %c0_4] : memref<32x1xf32, #tpu.memory_space<vmem>>, vector<32x1xf32>
    %cst = arith.constant dense<0.000000e+00> : vector<32x128xf32>
    %3 = tpu.matmul %1, %0, %cst {dimension_numbers = #tpu.dot_dimension_numbers<[1], [0], [0], [1], [0, 0, 1, 1], [], []>} : vector<32x4xf32>, vector<4x128xf32>, vector<32x128xf32> -> vector<32x128xf32>
    %4 = vector.broadcast %2 : vector<32x1xf32> to vector<32x128xf32>
    %5 = arith.addf %3, %4 : vector<32x128xf32>
    %cst_5 = arith.constant 0.000000e+00 : f32
    %6 = vector.broadcast %cst_5 : f32 to vector<32x128xf32>
    %7 = arith.cmpf ogt, %5, %6 : vector<32x128xf32>
    %cst_6 = arith.constant 1.000000e-01 : f32
    %8 = vector.broadcast %cst_6 : f32 to vector<32x128xf32>
    %9 = arith.mulf %8, %5 : vector<32x128xf32>
    %10 = arith.select %7, %5, %9 : vector<32x128xi1>, vector<32x128xf32>
    %c0_7 = arith.constant 0 : index
    %c0_8 = arith.constant 0 : index
    %11 = vector.load %arg4[%c0_7, %c0_8] : memref<32x32xf32, #tpu.memory_space<vmem>>, vector<32x32xf32>
    %c0_9 = arith.constant 0 : index
    %c0_10 = arith.constant 0 : index
    %12 = vector.load %arg5[%c0_9, %c0_10] : memref<32x1xf32, #tpu.memory_space<vmem>>, vector<32x1xf32>
    %cst_11 = arith.constant dense<0.000000e+00> : vector<32x128xf32>
    %13 = tpu.matmul %11, %10, %cst_11 {dimension_numbers = #tpu.dot_dimension_numbers<[1], [0], [0], [1], [0, 0, 1, 1], [], []>} : vector<32x32xf32>, vector<32x128xf32>, vector<32x128xf32> -> vector<32x128xf32>
    %14 = vector.broadcast %12 : vector<32x1xf32> to vector<32x128xf32>
    %15 = arith.addf %13, %14 : vector<32x128xf32>
    %cst_12 = arith.constant 0.000000e+00 : f32
    %16 = vector.broadcast %cst_12 : f32 to vector<32x128xf32>
    %17 = arith.cmpf ogt, %15, %16 : vector<32x128xf32>
    %cst_13 = arith.constant 1.000000e-01 : f32
    %18 = vector.broadcast %cst_13 : f32 to vector<32x128xf32>
    %19 = arith.mulf %18, %15 : vector<32x128xf32>
    %20 = arith.select %17, %15, %19 : vector<32x128xi1>, vector<32x128xf32>
    %c0_14 = arith.constant 0 : index
    %c0_15 = arith.constant 0 : index
    %21 = vector.load %arg6[%c0_14, %c0_15] : memref<8x32xf32, #tpu.memory_space<vmem>>, vector<8x32xf32>
    %c0_16 = arith.constant 0 : index
    %c0_17 = arith.constant 0 : index
    %22 = vector.load %arg7[%c0_16, %c0_17] : memref<8x1xf32, #tpu.memory_space<vmem>>, vector<8x1xf32>
    %cst_18 = arith.constant dense<0.000000e+00> : vector<8x128xf32>
    %23 = tpu.matmul %21, %20, %cst_18 {dimension_numbers = #tpu.dot_dimension_numbers<[1], [0], [0], [1], [0, 0, 1, 1], [], []>} : vector<8x32xf32>, vector<32x128xf32>, vector<8x128xf32> -> vector<8x128xf32>
    %24 = vector.broadcast %22 : vector<8x1xf32> to vector<8x128xf32>
    %25 = arith.addf %23, %24 : vector<8x128xf32>
    %c0_19 = arith.constant 0 : index
    %c0_20 = arith.constant 0 : index
    %26 = vector.load %arg8[%c0_19, %c0_20] : memref<8x128xf32, #tpu.memory_space<vmem>>, vector<8x128xf32>
    tpu.vector_store %arg8[%c0_19, %c0_20], %25 {strides = array<i32>} : memref<8x128xf32, #tpu.memory_space<vmem>>, vector<8x128xf32>,
    return
  }
  func.func @transform_0(%arg0: i32) -> (i32, i32) {
    %c0_i32 = arith.constant 0 : i32
    %c0_i32_0 = arith.constant 0 : i32
    return %c0_i32, %arg0 : i32, i32
  }
  func.func @transform_1(%arg0: i32) -> (i32, i32) {
    %c0_i32 = arith.constant 0 : i32
    %c0_i32_0 = arith.constant 0 : i32
    %c0_i32_1 = arith.constant 0 : i32
    return %c0_i32, %c0_i32_0 : i32, i32
  }
  func.func @transform_2(%arg0: i32) -> (i32, i32) {
    %c0_i32 = arith.constant 0 : i32
    %c0_i32_0 = arith.constant 0 : i32
    %c0_i32_1 = arith.constant 0 : i32
    return %c0_i32, %c0_i32_0 : i32, i32
  }
  func.func @transform_3(%arg0: i32) -> (i32, i32) {
    %c0_i32 = arith.constant 0 : i32
    %c0_i32_0 = arith.constant 0 : i32
    %c0_i32_1 = arith.constant 0 : i32
    return %c0_i32, %c0_i32_0 : i32, i32
  }
  func.func @transform_4(%arg0: i32) -> (i32, i32) {
    %c0_i32 = arith.constant 0 : i32
    %c0_i32_0 = arith.constant 0 : i32
    %c0_i32_1 = arith.constant 0 : i32
    return %c0_i32, %c0_i32_0 : i32, i32
  }
  func.func @transform_5(%arg0: i32) -> (i32, i32) {
    %c0_i32 = arith.constant 0 : i32
    %c0_i32_0 = arith.constant 0 : i32
    %c0_i32_1 = arith.constant 0 : i32
    return %c0_i32, %c0_i32_0 : i32, i32
  }
  func.func @transform_6(%arg0: i32) -> (i32, i32) {
    %c0_i32 = arith.constant 0 : i32
    %c0_i32_0 = arith.constant 0 : i32
    %c0_i32_1 = arith.constant 0 : i32
    return %c0_i32, %c0_i32_0 : i32, i32
  }
  func.func @transform_7(%arg0: i32) -> (i32, i32) {
    %c0_i32 = arith.constant 0 : i32
    %c0_i32_0 = arith.constant 0 : i32
    return %c0_i32, %arg0 : i32, i32
  }
}

</mosaic_0001>

<llo_original>
// kernel: tpu_custom_call.1
$region0: #{tpu_custom_call.1}
  #allocation0 [shape = 'u32[]', space=smem, size = 0x4, offset = 0x4, fixed_abs, tag = 'smem constant byte address 0x4 - core index']
  #allocation1 [shape = 'u32[144,128]{1,0:T(1,128)}', space=vmem, size = 0x12000, scoped, tag = 'internal scratch']
  %s0 = inlined_call_operand.vmem [shape: f32[4,128], index: 0, kind: input, shape index: {}]
  %s1 = inlined_call_operand.vmem [shape: f32[32,4], index: 1, kind: input, shape index: {}]
  %s2 = inlined_call_operand.vmem [shape: f32[32,1], index: 2, kind: input, shape index: {}]
  %s3 = inlined_call_operand.vmem [shape: f32[32,32], index: 3, kind: input, shape index: {}]
  %s4 = inlined_call_operand.vmem [shape: f32[32,1], index: 4, kind: input, shape index: {}]
  %s5 = inlined_call_operand.vmem [shape: f32[8,32], index: 5, kind: input, shape index: {}]
  %s6 = inlined_call_operand.vmem [shape: f32[8,1], index: 6, kind: input, shape index: {}]
  %s7 = inlined_call_operand.hbm [shape: f32[8,128], index: 7, kind: output, shape index: {}]
  %s8 = sld [smem:[#allocation0]]
  $region38: #{tpu_custom_call.1} parent=0
    _
  %s10 = ssub.s32 1, %s8
  %s11 = scalar_select 0, %s10, %s8
  $region1: #{tpu_custom_call.1} parent=0
    #allocation2 [shape = 'u8[4096]{0}', space=vmem, size = 0x1000, scoped, tag = 'output window, operand 0, single buffered']
    #allocation3 [shape = 's32[1]{0}', space=sflag, size = 0x4, scoped, tag = 'scoped memory for tpu_custom_call.1']
    %12 = vsyncpa [#allocation3], 0
    // Predicated region
    $region2: #{tpu_custom_call.1} parent=1 // pred_check
      _
    $region3: #{tpu_custom_call.1} parent=1 // pred_check_branch
      %14 = sbr.rel (0) target = $region5
    $region4: #{tpu_custom_call.1} parent=1 // pred_region
      _
    $region5: #{tpu_custom_call.1} parent=1 // pred_fallthru
      _
    // Predicated region
    $region6: #{tpu_custom_call.1} parent=1 // pred_check
      _
    $region7: #{tpu_custom_call.1} parent=1 // pred_check_branch
      %16 = sbr.rel (0) target = $region9
    $region8: #{tpu_custom_call.1} parent=1 // pred_region
      _
    $region9: #{tpu_custom_call.1} parent=1 // pred_fallthru
      _
    // Predicated region
    $region10: #{tpu_custom_call.1} parent=1 // pred_check
      _
    $region11: #{tpu_custom_call.1} parent=1 // pred_check_branch
      %18 = sbr.rel (0) target = $region13
    $region12: #{tpu_custom_call.1} parent=1 // pred_region
      _
    $region13: #{tpu_custom_call.1} parent=1 // pred_fallthru
      _
    // Predicated region
    $region14: #{tpu_custom_call.1} parent=1 // pred_check
      _
    $region15: #{tpu_custom_call.1} parent=1 // pred_check_branch
      %20 = sbr.rel (0) target = $region17
    $region16: #{tpu_custom_call.1} parent=1 // pred_region
      _
    $region17: #{tpu_custom_call.1} parent=1 // pred_fallthru
      _
    // Predicated region
    $region18: #{tpu_custom_call.1} parent=1 // pred_check
      _
    $region19: #{tpu_custom_call.1} parent=1 // pred_check_branch
      %22 = sbr.rel (0) target = $region21
    $region20: #{tpu_custom_call.1} parent=1 // pred_region
      _
    $region21: #{tpu_custom_call.1} parent=1 // pred_fallthru
      _
    // Predicated region
    $region22: #{tpu_custom_call.1} parent=1 // pred_check
      _
    $region23: #{tpu_custom_call.1} parent=1 // pred_check_branch
      %24 = sbr.rel (0) target = $region25
    $region24: #{tpu_custom_call.1} parent=1 // pred_region
      _
    $region25: #{tpu_custom_call.1} parent=1 // pred_fallthru
      _
    // Predicated region
    $region26: #{tpu_custom_call.1} parent=1 // pred_check
      _
    $region27: #{tpu_custom_call.1} parent=1 // pred_check_branch
      %26 = sbr.rel (0) target = $region29
    $region28: #{tpu_custom_call.1} parent=1 // pred_region
      _
    $region29: #{tpu_custom_call.1} parent=1 // pred_fallthru
      _
    %v27 = vld [vmem:[%s0] sm:$0xf]
    %v28 = vld [vmem:[%s1] sm:$0xff]
    %v29 = vld [vmem:[%s1 + $0x8] sm:$0xff]
    %v30 = vld [vmem:[%s1 + $0x10] sm:$0xff]
    %v31 = vld [vmem:[%s1 + $0x18] sm:$0xff]
    %v32 = vld [vmem:[%s2] sm:$0xff]
    %v33 = vld [vmem:[%s2 + $0x8] sm:$0xff]
    %v34 = vld [vmem:[%s2 + $0x10] sm:$0xff]
    %v35 = vld [vmem:[%s2 + $0x18] sm:$0xff]
    %37 = vset.pattern.permute.xlu0 0
    %38 = vperm.xlu0 %37, %v32
    %v39 = vpop.permute.xlu0 %38
    %42 = vset.pattern.permute.xlu0 0
    %43 = vperm.xlu0 %42, %v33
    %v44 = vpop.permute.xlu0 %43
    %47 = vset.pattern.permute.xlu0 0
    %48 = vperm.xlu0 %47, %v34
    %v49 = vpop.permute.xlu0 %48
    %52 = vset.pattern.permute.xlu0 0
    %53 = vperm.xlu0 %52, %v35
    %v54 = vpop.permute.xlu0 %53
    %vm56 = vcmask 31744
    %v58 = vsel %vm56, %v28, 0
    %v61 = vsel %vm56, %v29, 0
    %v64 = vsel %vm56, %v30, 0
    %v67 = vsel %vm56, %v31, 0
    %vm69 = vcmask 1043456
    %v71 = vsel %vm69, %v27, 0
    %73 = vmatprep.subr.mxu0 0.0
    %74 = vmatpush1.msra.mxu0 %v71
    %75 = vmatprep.subr.mxu0 0.0
    %76 = vmatpush1.msra.mxu0 0.0
    %77 = vmatprep.subr.mxu0 0.0
    %78 = vmatpush1.msra.mxu0 0.0
    %79 = vmatprep.subr.mxu0 0.0
    %80 = vmatpush1.msra.mxu0 0.0
    %81 = vmatprep.subr.mxu0 0.0
    %82 = vmatpush1.msra.mxu0 0.0
    %83 = vmatprep.subr.mxu0 0.0
    %84 = vmatpush1.msra.mxu0 0.0
    %85 = vmatprep.subr.mxu0 0.0
    %86 = vmatpush1.msra.mxu0 0.0
    %87 = vmatprep.subr.mxu0 0.0
    %88 = vmatpush1.msra.mxu0 0.0
    %89 = vmatprep.subr.mxu0 0.0
    %90 = vmatpush1.msra.mxu0 0.0
    %91 = vmatprep.subr.mxu0 0.0
    %92 = vmatpush1.msra.mxu0 0.0
    %93 = vmatprep.subr.mxu0 0.0
    %94 = vmatpush1.msra.mxu0 0.0
    %95 = vmatprep.subr.mxu0 0.0
    %96 = vmatpush1.msra.mxu0 0.0
    %97 = vmatprep.subr.mxu0 0.0
    %98 = vmatpush1.msra.mxu0 0.0
    %99 = vmatprep.subr.mxu0 0.0
    %100 = vmatpush1.msra.mxu0 0.0
    %101 = vmatprep.subr.mxu0 0.0
    %102 = vmatpush1.msra.mxu0 0.0
    %103 = vmatprep.subr.mxu0 0.0
    %104 = vmatpush1.msra.mxu0 0.0
    %105 = vmatprep.subr.mxu0 0.0
    %106 = vmatpush1.msra.mxu0 0.0
    %107 = vmatprep.subr.mxu0 0.0
    %108 = vmatpush1.msra.mxu0 0.0
    %109 = vmatprep.subr.mxu0 0.0
    %110 = vmatpush1.msra.mxu0 0.0
    %111 = vmatprep.subr.mxu0 0.0
    %112 = vmatpush1.msra.mxu0 0.0
    %113 = vmatprep.subr.mxu0 0.0
    %114 = vmatpush1.msra.mxu0 0.0
    %115 = vmatprep.subr.mxu0 0.0
    %116 = vmatpush1.msra.mxu0 0.0
    %117 = vmatprep.subr.mxu0 0.0
    %118 = vmatpush1.msra.mxu0 0.0
    %119 = vmatprep.subr.mxu0 0.0
    %120 = vmatpush1.msra.mxu0 0.0
    %121 = vmatprep.subr.mxu0 0.0
    %122 = vmatpush1.msra.mxu0 0.0
    %123 = vmatprep.subr.mxu0 0.0
    %124 = vmatpush1.msra.mxu0 0.0
    %125 = vmatprep.subr.mxu0 0.0
    %126 = vmatpush1.msra.mxu0 0.0
    %127 = vmatprep.subr.mxu0 0.0
    %128 = vmatpush1.msra.mxu0 0.0
    %129 = vmatprep.subr.mxu0 0.0
    %130 = vmatpush1.msra.mxu0 0.0
    %131 = vmatprep.subr.mxu0 0.0
    %132 = vmatpush1.msra.mxu0 0.0
    %133 = vmatprep.subr.mxu0 0.0
    %134 = vmatpush1.msra.mxu0 0.0
    %135 = vmatprep.subr.mxu0 0.0
    %136 = vmatpush1.msra.mxu0 0.0
    %137 = vmatprep.mubr.f32.mxu0 0.0
    %138 = vmatmul.mubr.f32.gmra.mrb[0].mxu0 %v58
    %v139 = vpop.f32.mrb[0].mxu0
    %v140 = vadd.f32 %v39, %v139
    %v141 = vpop.f32.mrb[0].mxu0
    %142 = vmatprep.mubr.f32.mxu0 0.0
    %143 = vmatmul.mubr.f32.gmra.mrb[0].mxu0 %v61
    %v144 = vpop.f32.mrb[0].mxu0
    %v145 = vadd.f32 %v44, %v144
    %v146 = vpop.f32.mrb[0].mxu0
    %147 = vmatprep.mubr.f32.mxu0 0.0
    %148 = vmatmul.mubr.f32.gmra.mrb[0].mxu0 %v64
    %v149 = vpop.f32.mrb[0].mxu0
    %v150 = vadd.f32 %v49, %v149
    %v151 = vpop.f32.mrb[0].mxu0
    %152 = vmatprep.mubr.f32.mxu0 0.0
    %153 = vmatmul.mubr.f32.gmra.mrb[0].mxu0 %v67
    %v154 = vpop.f32.mrb[0].mxu0
    %v155 = vadd.f32 %v54, %v154
    %v156 = vpop.f32.mrb[0].mxu0
    %157 = vdwg.mxu0
    %vm158 = vcmp.gt.f32.partialorder %v140, 0.0
    %vm159 = vcmp.gt.f32.partialorder %v145, 0.0
    %vm160 = vcmp.gt.f32.partialorder %v150, 0.0
    %vm161 = vcmp.gt.f32.partialorder %v155, 0.0
    %v162 = vmul.f32 %v140, 0.1
    %v163 = vmul.f32 %v145, 0.1
    %v164 = vmul.f32 %v150, 0.1
    %v165 = vmul.f32 %v155, 0.1
    %v166 = vsel %vm158, %v140, %v162
    %v167 = vsel %vm159, %v145, %v163
    %v168 = vsel %vm160, %v150, %v164
    %v169 = vsel %vm161, %v155, %v165
    %v170 = vld [vmem:[%s3] sm:$0xff]
    %v171 = vld [vmem:[%s3 + $0x8] sm:$0xff]
    %v172 = vld [vmem:[%s3 + $0x10] sm:$0xff]
    %v173 = vld [vmem:[%s3 + $0x18] sm:$0xff]
    %v174 = vld [vmem:[%s4] sm:$0xff]
    %v175 = vld [vmem:[%s4 + $0x8] sm:$0xff]
    %v176 = vld [vmem:[%s4 + $0x10] sm:$0xff]
    %v177 = vld [vmem:[%s4 + $0x18] sm:$0xff]
    %179 = vset.pattern.permute.xlu0 0
    %180 = vperm.xlu0 %179, %v174
    %v181 = vpop.permute.xlu0 %180
    %184 = vset.pattern.permute.xlu0 0
    %185 = vperm.xlu0 %184, %v175
    %v186 = vpop.permute.xlu0 %185
    %189 = vset.pattern.permute.xlu0 0
    %190 = vperm.xlu0 %189, %v176
    %v191 = vpop.permute.xlu0 %190
    %194 = vset.pattern.permute.xlu0 0
    %195 = vperm.xlu0 %194, %v177
    %v196 = vpop.permute.xlu0 %195
    %vm198 = vcmask 261120
    %v200 = vsel %vm198, %v170, 0
    %v203 = vsel %vm198, %v171, 0
    %v206 = vsel %vm198, %v172, 0
    %v209 = vsel %vm198, %v173, 0
    %211 = vmatprep.subr.mxu0 0.0
    %212 = vmatpush1.msra.mxu0 %v166
    %213 = vmatprep.subr.mxu0 0.0
    %214 = vmatpush1.msra.mxu0 %v167
    %215 = vmatprep.subr.mxu0 0.0
    %216 = vmatpush1.msra.mxu0 %v168
    %217 = vmatprep.subr.mxu0 0.0
    %218 = vmatpush1.msra.mxu0 %v169
    %219 = vmatprep.subr.mxu0 0.0
    %220 = vmatpush1.msra.mxu0 0.0
    %221 = vmatprep.subr.mxu0 0.0
    %222 = vmatpush1.msra.mxu0 0.0
    %223 = vmatprep.subr.mxu0 0.0
    %224 = vmatpush1.msra.mxu0 0.0
    %225 = vmatprep.subr.mxu0 0.0
    %226 = vmatpush1.msra.mxu0 0.0
    %227 = vmatprep.subr.mxu0 0.0
    %228 = vmatpush1.msra.mxu0 0.0
    %229 = vmatprep.subr.mxu0 0.0
    %230 = vmatpush1.msra.mxu0 0.0
    %231 = vmatprep.subr.mxu0 0.0
    %232 = vmatpush1.msra.mxu0 0.0
    %233 = vmatprep.subr.mxu0 0.0
    %234 = vmatpush1.msra.mxu0 0.0
    %235 = vmatprep.subr.mxu0 0.0
    %236 = vmatpush1.msra.mxu0 0.0
    %237 = vmatprep.subr.mxu0 0.0
    %238 = vmatpush1.msra.mxu0 0.0
    %239 = vmatprep.subr.mxu0 0.0
    %240 = vmatpush1.msra.mxu0 0.0
    %241 = vmatprep.subr.mxu0 0.0
    %242 = vmatpush1.msra.mxu0 0.0
    %243 = vmatprep.subr.mxu0 0.0
    %244 = vmatpush1.msra.mxu0 0.0
    %245 = vmatprep.subr.mxu0 0.0
    %246 = vmatpush1.msra.mxu0 0.0
    %247 = vmatprep.subr.mxu0 0.0
    %248 = vmatpush1.msra.mxu0 0.0
    %249 = vmatprep.subr.mxu0 0.0
    %250 = vmatpush1.msra.mxu0 0.0
    %251 = vmatprep.subr.mxu0 0.0
    %252 = vmatpush1.msra.mxu0 0.0
    %253 = vmatprep.subr.mxu0 0.0
    %254 = vmatpush1.msra.mxu0 0.0
    %255 = vmatprep.subr.mxu0 0.0
    %256 = vmatpush1.msra.mxu0 0.0
    %257 = vmatprep.subr.mxu0 0.0
    %258 = vmatpush1.msra.mxu0 0.0
    %259 = vmatprep.subr.mxu0 0.0
    %260 = vmatpush1.msra.mxu0 0.0
    %261 = vmatprep.subr.mxu0 0.0
    %262 = vmatpush1.msra.mxu0 0.0
    %263 = vmatprep.subr.mxu0 0.0
    %264 = vmatpush1.msra.mxu0 0.0
    %265 = vmatprep.subr.mxu0 0.0
    %266 = vmatpush1.msra.mxu0 0.0
    %267 = vmatprep.subr.mxu0 0.0
    %268 = vmatpush1.msra.mxu0 0.0
    %269 = vmatprep.subr.mxu0 0.0
    %270 = vmatpush1.msra.mxu0 0.0
    %271 = vmatprep.subr.mxu0 0.0
    %272 = vmatpush1.msra.mxu0 0.0
    %273 = vmatprep.subr.mxu0 0.0
    %274 = vmatpush1.msra.mxu0 0.0
    %275 = vmatprep.mubr.f32.mxu0 0.0
    %276 = vmatmul.mubr.f32.gmra.mrb[0].mxu0 %v200
    %v277 = vpop.f32.mrb[0].mxu0
    %v278 = vadd.f32 %v181, %v277
    %v279 = vpop.f32.mrb[0].mxu0
    %280 = vmatprep.mubr.f32.mxu0 0.0
    %281 = vmatmul.mubr.f32.gmra.mrb[0].mxu0 %v203
    %v282 = vpop.f32.mrb[0].mxu0
    %v283 = vadd.f32 %v186, %v282
    %v284 = vpop.f32.mrb[0].mxu0
    %285 = vmatprep.mubr.f32.mxu0 0.0
    %286 = vmatmul.mubr.f32.gmra.mrb[0].mxu0 %v206
    %v287 = vpop.f32.mrb[0].mxu0
    %v288 = vadd.f32 %v191, %v287
    %v289 = vpop.f32.mrb[0].mxu0
    %290 = vmatprep.mubr.f32.mxu0 0.0
    %291 = vmatmul.mubr.f32.gmra.mrb[0].mxu0 %v209
    %v292 = vpop.f32.mrb[0].mxu0
    %v293 = vadd.f32 %v196, %v292
    %v294 = vpop.f32.mrb[0].mxu0
    %295 = vdwg.mxu0
    %vm296 = vcmp.gt.f32.partialorder %v278, 0.0
    %vm297 = vcmp.gt.f32.partialorder %v283, 0.0
    %vm298 = vcmp.gt.f32.partialorder %v288, 0.0
    %vm299 = vcmp.gt.f32.partialorder %v293, 0.0
    %v300 = vmul.f32 %v278, 0.1
    %v301 = vmul.f32 %v283, 0.1
    %v302 = vmul.f32 %v288, 0.1
    %v303 = vmul.f32 %v293, 0.1
    %v304 = vsel %vm296, %v278, %v300
    %v305 = vsel %vm297, %v283, %v301
    %v306 = vsel %vm298, %v288, %v302
    %v307 = vsel %vm299, %v293, %v303
    %v308 = vld [vmem:[%s5] sm:$0xff]
    %v309 = vld [vmem:[%s6] sm:$0xff]
    %311 = vset.pattern.permute.xlu0 0
    %312 = vperm.xlu0 %311, %v309
    %v313 = vpop.permute.xlu0 %312
    %v316 = vsel %vm198, %v308, 0
    %318 = vmatprep.subr.mxu0 0.0
    %319 = vmatpush1.msra.mxu0 %v304
    %320 = vmatprep.subr.mxu0 0.0
    %321 = vmatpush1.msra.mxu0 %v305
    %322 = vmatprep.subr.mxu0 0.0
    %323 = vmatpush1.msra.mxu0 %v306
    %324 = vmatprep.subr.mxu0 0.0
    %325 = vmatpush1.msra.mxu0 %v307
    %326 = vmatprep.subr.mxu0 0.0
    %327 = vmatpush1.msra.mxu0 0.0
    %328 = vmatprep.subr.mxu0 0.0
    %329 = vmatpush1.msra.mxu0 0.0
    %330 = vmatprep.subr.mxu0 0.0
    %331 = vmatpush1.msra.mxu0 0.0
    %332 = vmatprep.subr.mxu0 0.0
    %333 = vmatpush1.msra.mxu0 0.0
    %334 = vmatprep.subr.mxu0 0.0
    %335 = vmatpush1.msra.mxu0 0.0
    %336 = vmatprep.subr.mxu0 0.0
    %337 = vmatpush1.msra.mxu0 0.0
    %338 = vmatprep.subr.mxu0 0.0
    %339 = vmatpush1.msra.mxu0 0.0
    %340 = vmatprep.subr.mxu0 0.0
    %341 = vmatpush1.msra.mxu0 0.0
    %342 = vmatprep.subr.mxu0 0.0
    %343 = vmatpush1.msra.mxu0 0.0
    %344 = vmatprep.subr.mxu0 0.0
    %345 = vmatpush1.msra.mxu0 0.0
    %346 = vmatprep.subr.mxu0 0.0
    %347 = vmatpush1.msra.mxu0 0.0
    %348 = vmatprep.subr.mxu0 0.0
    %349 = vmatpush1.msra.mxu0 0.0
    %350 = vmatprep.subr.mxu0 0.0
    %351 = vmatpush1.msra.mxu0 0.0
    %352 = vmatprep.subr.mxu0 0.0
    %353 = vmatpush1.msra.mxu0 0.0
    %354 = vmatprep.subr.mxu0 0.0
    %355 = vmatpush1.msra.mxu0 0.0
    %356 = vmatprep.subr.mxu0 0.0
    %357 = vmatpush1.msra.mxu0 0.0
    %358 = vmatprep.subr.mxu0 0.0
    %359 = vmatpush1.msra.mxu0 0.0
    %360 = vmatprep.subr.mxu0 0.0
    %361 = vmatpush1.msra.mxu0 0.0
    %362 = vmatprep.subr.mxu0 0.0
    %363 = vmatpush1.msra.mxu0 0.0
    %364 = vmatprep.subr.mxu0 0.0
    %365 = vmatpush1.msra.mxu0 0.0
    %366 = vmatprep.subr.mxu0 0.0
    %367 = vmatpush1.msra.mxu0 0.0
    %368 = vmatprep.subr.mxu0 0.0
    %369 = vmatpush1.msra.mxu0 0.0
    %370 = vmatprep.subr.mxu0 0.0
    %371 = vmatpush1.msra.mxu0 0.0
    %372 = vmatprep.subr.mxu0 0.0
    %373 = vmatpush1.msra.mxu0 0.0
    %374 = vmatprep.subr.mxu0 0.0
    %375 = vmatpush1.msra.mxu0 0.0
    %376 = vmatprep.subr.mxu0 0.0
    %377 = vmatpush1.msra.mxu0 0.0
    %378 = vmatprep.subr.mxu0 0.0
    %379 = vmatpush1.msra.mxu0 0.0
    %380 = vmatprep.subr.mxu0 0.0
    %381 = vmatpush1.msra.mxu0 0.0
    %382 = vmatprep.mubr.f32.mxu0 0.0
    %383 = vmatmul.mubr.f32.gmra.mrb[0].mxu0 %v316
    %v384 = vpop.f32.mrb[0].mxu0
    %v385 = vadd.f32 %v313, %v384
    %v386 = vpop.f32.mrb[0].mxu0
    %387 = vdwg.mxu0
    %388 = vst [vmem:[#allocation2] sm:$0xff] %v385
    // Predicated region
    $region30: #{tpu_custom_call.1} parent=1 // pred_check
      _
    $region31: #{tpu_custom_call.1} parent=1 // pred_check_branch
      %390 = sbr.rel (0) target = $region33
    $region32: #{tpu_custom_call.1} parent=1 // pred_region
      %s392 = ssub.s32 128, 128
      %393 = vsyncadd [#allocation3], %s392
      %s395 = sshll.u32 [#allocation2], 4
      %s396 = int_to_ptr.vmem [resolvable:$true] %s395
      %398 = dma.vmem_to_hbm [thread:$0]  %s396, 128, %s7, [#allocation3]
    $region33: #{tpu_custom_call.1} parent=1 // pred_fallthru
      _
    // Predicated region
    $region34: #{tpu_custom_call.1} parent=1 // pred_check
      _
    $region35: #{tpu_custom_call.1} parent=1 // pred_check_branch
      %400 = sbr.rel (0) target = $region37
    $region36: #{tpu_custom_call.1} parent=1 // pred_region
      %401 = dma.done [#allocation3], 128
    $region37: #{tpu_custom_call.1} parent=1 // pred_fallthru
      _
    %402 = vsyncpa [#allocation3], 1

</llo_original>
